<compile_context>
chip_gen: v5e
topology: v5e:2x2
jax: 0.10.0
libtpu: 0.0.40
codegen_flags: <defaults>
</compile_context>

<pallas_src>
import jax
import jax.numpy as jnp
from jax import lax
from jax.experimental import pallas as pl
from jax.experimental.pallas import tpu as pltpu


# ----------------------------------------------------------------------------
# Fused conv kernel:
#   out = [relu(bn_e(.))]( Conv( [relu(bn_p(.))](x) ) ) [+ residual]
# ----------------------------------------------------------------------------
def _make_fused_conv_kernel(taps, Ho, Wo, has_prologue, has_epilogue, has_residual):
    """taps: tuple of (phase, row_offset, col_offset), one per conv tap."""

    def kernel(*refs):
        it = iter(refs)
        x_ref = next(it)
        w_ref = next(it)
        if has_prologue:
            p_scale_ref = next(it)
            p_shift_ref = next(it)
        if has_epilogue:
            e_scale_ref = next(it)
            e_shift_ref = next(it)
        if has_residual:
            res_ref = next(it)
        o_ref = next(it)

        cin = x_ref.shape[-1]
        cout = o_ref.shape[-1]
        m = Ho * Wo

        if has_prologue:
            p_scale = p_scale_ref[...]          # (1, Cin) f32
            p_shift = p_shift_ref[...]          # (1, Cin) f32

        acc = jnp.zeros((m, cout), jnp.float32)
        for t, (p, oy, ox) in enumerate(taps):
            a = x_ref[0, p, oy:oy + Ho, ox:ox + Wo, :]      # (Ho, Wo, Cin) f32
            a = a.reshape(m, cin)
            if has_prologue:                                 # fused BN + ReLU
                a = jnp.maximum(a * p_scale + p_shift, 0.0)
            # bf16 MXU operands, f32 accumulation.
            acc = acc + jnp.dot(a.astype(jnp.bfloat16), w_ref[t],
                                preferred_element_type=jnp.float32)

        if has_epilogue:                                     # next BN + ReLU fused
            acc = jnp.maximum(acc * e_scale_ref[...] + e_shift_ref[...], 0.0)
        if has_residual:                                     # residual add fused
            acc = acc + res_ref[0].reshape(m, cout)

        o_ref[0] = acc.reshape(Ho, Wo, cout).astype(o_ref.dtype)

    return kernel


def fused_conv(x, conv, *, stride, padding, prologue=None, epilogue=None,
               residual=None):
    """Fused (BN+ReLU) -> Conv -> (BN+ReLU) / (+residual), NHWC, no bias.

    conv: dict with 'w' = (kh*kw, Cin, Cout) bf16 tap-major weights, 'kh', 'kw'.
    prologue / epilogue: optional (scale, shift) affine pairs (inference BN).
    """
    w_taps, kh, kw = conv['w'], conv['kh'], conv['kw']
    N, H, W, Cin = x.shape
    T, Cin2, Cout = w_taps.shape
    assert T == kh * kw and Cin2 == Cin
    # A fused prologue would also be applied to the conv's zero padding (wrong),
    # so only allow it for unpadded convolutions (the 1x1 convs in this block).
    assert prologue is None or padding == 0
    Ho = (H + 2 * padding - kh) // stride + 1
    Wo = (W + 2 * padding - kw) // stride + 1

    # Phase-decompose the input so every in-kernel tap read is a contiguous,
    # unit-stride (Ho, Wo, Cin) window (no im2col, no strided in-kernel loads).
    if kh == 1 and kw == 1:
        xs = x if stride == 1 else x[:, ::stride, ::stride, :]
        phases = xs[:, None]                                 # (N, 1, Ho, Wo, Cin)
        taps = ((0, 0, 0),)
    elif stride == 1:
        xp = jnp.pad(x, ((0, 0), (padding, padding), (padding, padding), (0, 0)))
        phases = xp[:, None]                                 # (N, 1, H+2p, W+2p, Cin)
        taps = tuple((0, dy, dx) for dy in range(kh) for dx in range(kw))
    else:
        s = stride
        Hq = Ho + (kh - 1) // s
        Wq = Wo + (kw - 1) // s
        pad_b = s * Hq - H - padding
        pad_r = s * Wq - W - padding
        assert pad_b >= 0 and pad_r >= 0
        xp = jnp.pad(x, ((0, 0), (padding, pad_b), (padding, pad_r), (0, 0)))
        phases = xp.reshape(N, Hq, s, Wq, s, Cin)
        phases = phases.transpose(0, 2, 4, 1, 3, 5).reshape(N, s * s, Hq, Wq, Cin)
        taps = tuple(((dy % s) * s + (dx % s), dy // s, dx // s)
                     for dy in range(kh) for dx in range(kw))

    P, Hq_, Wq_ = phases.shape[1:4]

    in_specs = [
        pl.BlockSpec((1, P, Hq_, Wq_, Cin), lambda n: (n, 0, 0, 0, 0)),
        pl.BlockSpec((T, Cin, Cout), lambda n: (0, 0, 0)),
    ]
    args = [phases, w_taps]
    if prologue is not None:
        ps, ph = prologue
        in_specs += [pl.BlockSpec((1, Cin), lambda n: (0, 0)),
                     pl.BlockSpec((1, Cin), lambda n: (0, 0))]
        args += [ps.reshape(1, Cin).astype(jnp.float32),
                 ph.reshape(1, Cin).astype(jnp.float32)]
    if epilogue is not None:
        es, eh = epilogue
        in_specs += [pl.BlockSpec((1, Cout), lambda n: (0, 0)),
                     pl.BlockSpec((1, Cout), lambda n: (0, 0))]
        args += [es.reshape(1, Cout).astype(jnp.float32),
                 eh.reshape(1, Cout).astype(jnp.float32)]
    if residual is not None:
        assert residual.shape == (N, Ho, Wo, Cout)
        in_specs.append(pl.BlockSpec((1, Ho, Wo, Cout), lambda n: (n, 0, 0, 0)))
        args.append(residual.astype(jnp.float32))

    kernel = _make_fused_conv_kernel(taps, Ho, Wo,
                                     prologue is not None,
                                     epilogue is not None,
                                     residual is not None)
    return pl.pallas_call(
        kernel,
        out_shape=jax.ShapeDtypeStruct((N, Ho, Wo, Cout), jnp.float32),
        grid=(N,),
        in_specs=in_specs,
        out_specs=pl.BlockSpec((1, Ho, Wo, Cout), lambda n: (n, 0, 0, 0)),
        compiler_params=pltpu.CompilerParams(
            dimension_semantics=("parallel",)),
    )(*args)


# ----------------------------------------------------------------------------
# PreActBottleneck parameters (PyTorch layout) and one-time kernel prep
# ----------------------------------------------------------------------------
def init_bottleneck_params(key, in_planes, planes, stride, expansion=4):
    ks = jax.random.split(key, 8)

    def conv_w(k, cout, cin, kh, kw):
        std = (2.0 / (cin * kh * kw)) ** 0.5
        return jax.random.normal(k, (cout, cin, kh, kw), jnp.float32) * std

    def bn_p(k, c):
        kg, kb, km, kv = jax.random.split(k, 4)
        return {'gamma': 1.0 + 0.1 * jax.random.normal(kg, (c,), jnp.float32),
                'beta': 0.1 * jax.random.normal(kb, (c,), jnp.float32),
                'mean': 0.1 * jax.random.normal(km, (c,), jnp.float32),
                'var': 1.0 + 0.1 * jax.random.uniform(kv, (c,), jnp.float32)}

    p = {'stride': stride,
         'bn1': bn_p(ks[0], in_planes),
         'conv1': conv_w(ks[1], planes, in_planes, 1, 1),
         'bn2': bn_p(ks[2], planes),
         'conv2': conv_w(ks[3], planes, planes, 3, 3),
         'bn3': bn_p(ks[4], planes),
         'conv3': conv_w(ks[5], expansion * planes, planes, 1, 1)}
    if stride != 1 or in_planes != expansion * planes:
        p['shortcut'] = conv_w(ks[6], expansion * planes, in_planes, 1, 1)
    return p


def prepare_params(p, eps=1e-5):
    """One-time prep: BN -> affine scale/shift, weights -> tap-major bf16."""
    def bn_affine(bn):
        scale = bn['gamma'] / jnp.sqrt(bn['var'] + eps)
        shift = bn['beta'] - bn['mean'] * scale
        return scale, shift

    def conv_entry(w):                 # OIHW f32 -> (kh*kw, Cin, Cout) bf16
        cout, cin, kh, kw = w.shape
        taps = jnp.transpose(w, (2, 3, 1, 0)).reshape(kh * kw, cin, cout)
        return {'w': taps.astype(jnp.bfloat16), 'kh': kh, 'kw': kw}

    prep = {'stride': p['stride'],
            'bn1': bn_affine(p['bn1']),
            'bn2': bn_affine(p['bn2']),
            'bn3': bn_affine(p['bn3']),
            'conv1': conv_entry(p['conv1']),
            'conv2': conv_entry(p['conv2']),
            'conv3': conv_entry(p['conv3'])}
    if 'shortcut' in p:
        prep['shortcut'] = conv_entry(p['shortcut'])
    return prep


def preact_bottleneck_forward(x_nchw, prep):
    stride = prep['stride']
    x = jnp.transpose(x_nchw, (0, 2, 3, 1)).astype(jnp.float32)     # -> NHWC
    bn1, bn2, bn3 = prep['bn1'], prep['bn2'], prep['bn3']

    # conv1( relu(bn1(x)) ), with relu(bn2(.)) fused into its epilogue.
    out = fused_conv(x, prep['conv1'], stride=1, padding=0,
                     prologue=bn1, epilogue=bn2)
    # conv2 over the already-activated tensor; relu(bn3(.)) fused into epilogue.
    out = fused_conv(out, prep['conv2'], stride=stride, padding=1, epilogue=bn3)
    # Shortcut: shortcut_conv( relu(bn1(x)) ) -- bn1 recomputed in the prologue
    # instead of materializing `input_out` in HBM -- or identity.
    if 'shortcut' in prep:
        shortcut = fused_conv(x, prep['shortcut'], stride=stride, padding=0,
                              prologue=bn1)
    else:
        shortcut = x
    # conv3 over the activated tensor with the residual add fused into the store.
    out = fused_conv(out, prep['conv3'], stride=1, padding=0, residual=shortcut)
    return jnp.transpose(out, (0, 3, 1, 2))                         # -> NCHW


# ----------------------------------------------------------------------------
# Pure-JAX reference (mirrors the kernel's bf16-operand / f32-accum arithmetic)
# ----------------------------------------------------------------------------
def reference_forward(x_nchw, p, eps=1e-5):
    def bn_relu(x, bn):
        scale = bn['gamma'] / jnp.sqrt(bn['var'] + eps)
        shift = bn['beta'] - bn['mean'] * scale
        return jnp.maximum(x * scale[None, :, None, None]
                           + shift[None, :, None, None], 0.0)

    def conv(x, w, stride, padding):
        return lax.conv_general_dilated(
            x.astype(jnp.bfloat16), w.astype(jnp.bfloat16),
            window_strides=(stride, stride),
            padding=[(padding, padding), (padding, padding)],
            dimension_numbers=('NCHW', 'OIHW', 'NCHW'),
            preferred_element_type=jnp.float32)

    out = bn_relu(x_nchw, p['bn1'])
    input_out = out
    out = conv(out, p['conv1'], 1, 0)
    out = bn_relu(out, p['bn2'])
    out = conv(out, p['conv2'], p['stride'], 1)
    out = bn_relu(out, p['bn3'])
    out = conv(out, p['conv3'], 1, 0)
    if 'shortcut' in p:
        shortcut = conv(input_out, p['shortcut'], p['stride'], 0)
    else:
        shortcut = x_nchw
    return out + shortcut


if __name__ == "__main__":
    key = jax.random.PRNGKey(0)
    kp_a, kx_a, kp_b, kx_b = jax.random.split(key, 4)

    # Case A: down-sampling bottleneck (stride=2, projection shortcut).
    params_a = init_bottleneck_params(kp_a, in_planes=16, planes=8, stride=2)
    prep_a = prepare_params(params_a)
    x_a = jax.random.normal(kx_a, (2, 16, 16, 16), jnp.float32)     # NCHW
    out_a = jax.block_until_ready(preact_bottleneck_forward(x_a, prep_a))
    ref_a = jax.block_until_ready(reference_forward(x_a, params_a))
    assert out_a.shape == (2, 32, 8, 8), out_a.shape
    assert bool(jnp.all(jnp.isfinite(out_a)))
    assert bool(jnp.allclose(out_a, ref_a, rtol=2e-2, atol=2e-2)), \
        float(jnp.max(jnp.abs(out_a - ref_a)))

    # Case B: identity-shortcut bottleneck (stride=1, in_planes == 4*planes).
    params_b = init_bottleneck_params(kp_b, in_planes=32, planes=8, stride=1)
    prep_b = prepare_params(params_b)
    x_b = jax.random.normal(kx_b, (2, 32, 16, 16), jnp.float32)     # NCHW
    out_b = jax.block_until_ready(preact_bottleneck_forward(x_b, prep_b))
    ref_b = jax.block_until_ready(reference_forward(x_b, params_b))
    assert out_b.shape == (2, 32, 16, 16), out_b.shape
    assert bool(jnp.all(jnp.isfinite(out_b)))
    assert bool(jnp.allclose(out_b, ref_b, rtol=2e-2, atol=2e-2)), \
        float(jnp.max(jnp.abs(out_b - ref_b)))

    print("KERNEL_OK")
</pallas_src>

<mosaic_0001>
module attributes {stable_mosaic.version = 11 : i64} {
  func.func @kernel(%arg0: i32, %arg1: memref<1x1x16x16x16xf32, #tpu.memory_space<vmem>>, %arg2: memref<1x16x8xbf16, #tpu.memory_space<vmem>>, %arg3: memref<1x16xf32, #tpu.memory_space<vmem>>, %arg4: memref<1x16xf32, #tpu.memory_space<vmem>>, %arg5: memref<1x8xf32, #tpu.memory_space<vmem>>, %arg6: memref<1x8xf32, #tpu.memory_space<vmem>>, %arg7: memref<1x16x16x8xf32, #tpu.memory_space<vmem>>) attributes {dimension_semantics = [#tpu.dimension_semantics<parallel>], iteration_bounds = array<i64: 2>, scalar_prefetch = 0 : i64, scratch_operands = 0 : i64, tpu.core_type = #tpu.core_type<tc>, window_params = [{transform_indices = @transform_0, window_bounds = array<i64: 1, 1, 16, 16, 16>}, {pipeline_mode = #tpu.pipeline_mode<synchronous>, transform_indices = @transform_1, window_bounds = array<i64: 1, 16, 8>}, {pipeline_mode = #tpu.pipeline_mode<synchronous>, transform_indices = @transform_2, window_bounds = array<i64: 1, 16>}, {pipeline_mode = #tpu.pipeline_mode<synchronous>, transform_indices = @transform_3, window_bounds = array<i64: 1, 16>}, {pipeline_mode = #tpu.pipeline_mode<synchronous>, transform_indices = @transform_4, window_bounds = array<i64: 1, 8>}, {pipeline_mode = #tpu.pipeline_mode<synchronous>, transform_indices = @transform_5, window_bounds = array<i64: 1, 8>}, {transform_indices = @transform_6, window_bounds = array<i64: 1, 16, 16, 8>}]} {
    %c0 = arith.constant 0 : index
    %c0_0 = arith.constant 0 : index
    %0 = vector.load %arg3[%c0, %c0_0] : memref<1x16xf32, #tpu.memory_space<vmem>>, vector<1x16xf32>
    %c0_1 = arith.constant 0 : index
    %c0_2 = arith.constant 0 : index
    %1 = vector.load %arg4[%c0_1, %c0_2] : memref<1x16xf32, #tpu.memory_space<vmem>>, vector<1x16xf32>
    %cst = arith.constant 0.000000e+00 : f32
    %2 = vector.broadcast %cst : f32 to vector<256x8xf32>
    %c0_3 = arith.constant 0 : index
    %c0_4 = arith.constant 0 : index
    %c0_5 = arith.constant 0 : index
    %c0_6 = arith.constant 0 : index
    %c0_7 = arith.constant 0 : index
    %3 = vector.load %arg1[%c0_3, %c0_4, %c0_5, %c0_6, %c0_7] : memref<1x1x16x16x16xf32, #tpu.memory_space<vmem>>, vector<1x1x16x16x16xf32>
    %4 = vector.shape_cast %3 : vector<1x1x16x16x16xf32> to vector<16x16x16xf32>
    %5 = vector.shape_cast %4 : vector<16x16x16xf32> to vector<256x16xf32>
    %6 = vector.broadcast %0 : vector<1x16xf32> to vector<256x16xf32>
    %7 = arith.mulf %5, %6 : vector<256x16xf32>
    %8 = vector.broadcast %1 : vector<1x16xf32> to vector<256x16xf32>
    %9 = arith.addf %7, %8 : vector<256x16xf32>
    %cst_8 = arith.constant 0.000000e+00 : f32
    %10 = vector.broadcast %cst_8 : f32 to vector<256x16xf32>
    %11 = arith.maximumf %9, %10 : vector<256x16xf32>
    %12 = arith.truncf %11 : vector<256x16xf32> to vector<256x16xbf16>
    %c0_9 = arith.constant 0 : index
    %c0_10 = arith.constant 0 : index
    %c0_11 = arith.constant 0 : index
    %13 = vector.load %arg2[%c0_9, %c0_10, %c0_11] : memref<1x16x8xbf16, #tpu.memory_space<vmem>>, vector<1x16x8xbf16>
    %14 = vector.shape_cast %13 : vector<1x16x8xbf16> to vector<16x8xbf16>
    %cst_12 = arith.constant dense<0.000000e+00> : vector<256x8xf32>
    %15 = tpu.matmul %12, %14, %cst_12 {dimension_numbers = #tpu.dot_dimension_numbers<[1], [0], [0], [1], [0, 0, 1, 1], [], []>} : vector<256x16xbf16>, vector<16x8xbf16>, vector<256x8xf32> -> vector<256x8xf32>
    %16 = arith.addf %2, %15 : vector<256x8xf32>
    %c0_13 = arith.constant 0 : index
    %c0_14 = arith.constant 0 : index
    %17 = vector.load %arg5[%c0_13, %c0_14] : memref<1x8xf32, #tpu.memory_space<vmem>>, vector<1x8xf32>
    %18 = vector.broadcast %17 : vector<1x8xf32> to vector<256x8xf32>
    %19 = arith.mulf %16, %18 : vector<256x8xf32>
    %c0_15 = arith.constant 0 : index
    %c0_16 = arith.constant 0 : index
    %20 = vector.load %arg6[%c0_15, %c0_16] : memref<1x8xf32, #tpu.memory_space<vmem>>, vector<1x8xf32>
    %21 = vector.broadcast %20 : vector<1x8xf32> to vector<256x8xf32>
    %22 = arith.addf %19, %21 : vector<256x8xf32>
    %cst_17 = arith.constant 0.000000e+00 : f32
    %23 = vector.broadcast %cst_17 : f32 to vector<256x8xf32>
    %24 = arith.maximumf %22, %23 : vector<256x8xf32>
    %25 = vector.shape_cast %24 : vector<256x8xf32> to vector<16x16x8xf32>
    %c0_18 = arith.constant 0 : index
    %c0_19 = arith.constant 0 : index
    %c0_20 = arith.constant 0 : index
    %c0_21 = arith.constant 0 : index
    %26 = vector.load %arg7[%c0_18, %c0_19, %c0_20, %c0_21] : memref<1x16x16x8xf32, #tpu.memory_space<vmem>>, vector<1x16x16x8xf32>
    %27 = vector.shape_cast %26 : vector<1x16x16x8xf32> to vector<16x16x8xf32>
    %28 = vector.shape_cast %25 : vector<16x16x8xf32> to vector<1x16x16x8xf32>
    tpu.vector_store %arg7[%c0_18, %c0_19, %c0_20, %c0_21], %28 {strides = array<i32>} : memref<1x16x16x8xf32, #tpu.memory_space<vmem>>, vector<1x16x16x8xf32>,
    return
  }
  func.func @transform_0(%arg0: i32) -> (i32, i32, i32, i32, i32) {
    %c0_i32 = arith.constant 0 : i32
    %c0_i32_0 = arith.constant 0 : i32
    %c0_i32_1 = arith.constant 0 : i32
    %c0_i32_2 = arith.constant 0 : i32
    %c0_i32_3 = arith.constant 0 : i32
    return %arg0, %c0_i32, %c0_i32_0, %c0_i32_1, %c0_i32_2 : i32, i32, i32, i32, i32
  }
  func.func @transform_1(%arg0: i32) -> (i32, i32, i32) {
    %c0_i32 = arith.constant 0 : i32
    %c0_i32_0 = arith.constant 0 : i32
    %c0_i32_1 = arith.constant 0 : i32
    %c0_i32_2 = arith.constant 0 : i32
    return %c0_i32, %c0_i32_0, %c0_i32_1 : i32, i32, i32
  }
  func.func @transform_2(%arg0: i32) -> (i32, i32) {
    %c0_i32 = arith.constant 0 : i32
    %c0_i32_0 = arith.constant 0 : i32
    %c0_i32_1 = arith.constant 0 : i32
    return %c0_i32, %c0_i32_0 : i32, i32
  }
  func.func @transform_3(%arg0: i32) -> (i32, i32) {
    %c0_i32 = arith.constant 0 : i32
    %c0_i32_0 = arith.constant 0 : i32
    %c0_i32_1 = arith.constant 0 : i32
    return %c0_i32, %c0_i32_0 : i32, i32
  }
  func.func @transform_4(%arg0: i32) -> (i32, i32) {
    %c0_i32 = arith.constant 0 : i32
    %c0_i32_0 = arith.constant 0 : i32
    %c0_i32_1 = arith.constant 0 : i32
    return %c0_i32, %c0_i32_0 : i32, i32
  }
  func.func @transform_5(%arg0: i32) -> (i32, i32) {
    %c0_i32 = arith.constant 0 : i32
    %c0_i32_0 = arith.constant 0 : i32
    %c0_i32_1 = arith.constant 0 : i32
    return %c0_i32, %c0_i32_0 : i32, i32
  }
  func.func @transform_6(%arg0: i32) -> (i32, i32, i32, i32) {
    %c0_i32 = arith.constant 0 : i32
    %c0_i32_0 = arith.constant 0 : i32
    %c0_i32_1 = arith.constant 0 : i32
    %c0_i32_2 = arith.constant 0 : i32
    return %arg0, %c0_i32, %c0_i32_0, %c0_i32_1 : i32, i32, i32, i32
  }
}

</mosaic_0001>

<llo_original>
// kernel: tpu_custom_call.1
$region0: #{tpu_custom_call.1}
  #allocation0 [shape = 'u32[]', space=smem, size = 0x4, offset = 0x4, fixed_abs, tag = 'smem constant byte address 0x4 - core index']
  #allocation1 [shape = 'u32[72,128]{1,0:T(1,128)}', space=vmem, size = 0x9000, scoped, tag = 'internal scratch']
  %s0 = inlined_call_operand.hbm [shape: f32[2,1,16,16,16], index: 0, kind: input, shape index: {}]
  %s1 = inlined_call_operand.vmem [shape: bf16[1,16,8], index: 1, kind: input, shape index: {}]
  %s2 = inlined_call_operand.vmem [shape: f32[1,16], index: 2, kind: input, shape index: {}]
  %s3 = inlined_call_operand.vmem [shape: f32[1,16], index: 3, kind: input, shape index: {}]
  %s4 = inlined_call_operand.vmem [shape: f32[1,8], index: 4, kind: input, shape index: {}]
  %s5 = inlined_call_operand.vmem [shape: f32[1,8], index: 5, kind: input, shape index: {}]
  %s6 = inlined_call_operand.vmem [shape: f32[2,16,16,8], index: 6, kind: output, shape index: {}]
  %s7 = sld [smem:[#allocation0]]
  $region61: #{tpu_custom_call.1} parent=0
    _
  %s9 = ssub.s32 1, %s7
  %s10 = scalar_select 0, %s9, %s7
  $region1: #{tpu_custom_call.1} parent=0
    #allocation2 [shape = 'u8[262144]{0}', space=vmem, size = 0x40000, scoped, tag = 'input window, operand 0']
    #allocation3 [shape = 's32[2]{0}', space=sflag, size = 0x8, scoped, tag = 'scoped memory for tpu_custom_call.1']
    %11 = vsyncpa [#allocation3], 0
    %s12 = scalar_lea.sflag [#allocation3], 1
    %13 = vsyncpa %s12, 0
    loop: start=0, step=1, limit=4
    $region2: #{tpu_custom_call.1} parent=1 // loop_pre_header
      _
    $region3: #{tpu_custom_call.1} parent=1 // loop_header
      %s15 = sphi 0, %s19
      %p16 = scmp.ge.s32.totalorder %s15, 4
      %s25 = sphi 0, %s27
      %s28 = sphi 0, %s25
      %s29 = sphi 0, %s28
      %s45 = sphi 0, %s29
      %s49 = sphi 0, %s49
      %s51 = sphi 0, %s49
      %s52 = sphi 0, %s51
      %s66 = sphi 0, %s52
      %s70 = sphi 0, %s70
      %s72 = sphi 0, %s70
      %s73 = sphi 0, %s72
      %s87 = sphi 0, %s73
      %s91 = sphi 0, %s91
      %s93 = sphi 0, %s91
      %s94 = sphi 0, %s93
      %s108 = sphi 0, %s94
      %s112 = sphi 0, %s112
      %s114 = sphi 0, %s112
      %s115 = sphi 0, %s114
      %s129 = sphi 0, %s115
      %s133 = sphi 0, %s133
      %s135 = sphi 0, %s133
      %s136 = sphi 0, %s135
      %s150 = sphi 0, %s136
      %s156 = sphi 0, %s158
      %s159 = sphi 0, %s156
      %s160 = sphi 0, %s159
      %s176 = sphi 0, %s160
    $region4: #{tpu_custom_call.1} parent=1 // loop_header_branch
      %18 = sbr.rel (%p16) target = $region8
    $region5: #{tpu_custom_call.1} parent=1 // loop_body
      %s20 = ssub.s32 %s15, 1
      %s21 = ssub.s32 %s15, 2
      %s22 = sadd.s32 %s15, 1
      %s23 = ssub.s32 %s15, %s22
      %p24 = scmp.eq.s32.totalorder %s23, 0
      %s26 = sadd.s32 %s25, 1
      %s27 = scalar_select %p24, %s25, %s26
      %p30 = pneg %p24
      %p31 = scmp.eq.s32.totalorder %s15, 1
      %p32 = por %p30, %p31
      %p33 = scmp.ne.s32.totalorder %s25, %s28
      %p34 = scmp.eq.s32.totalorder %s15, 0
      %p35 = por %p33, %p34
      %p36 = scmp.ne.s32.totalorder %s25, %s28
      %p37 = scmp.eq.s32.totalorder %s20, 1
      %p38 = por %p36, %p37
      %p39 = scmp.ne.s32.totalorder %s28, %s29
      %p40 = scmp.eq.s32.totalorder %s20, 0
      %p41 = por %p39, %p40
      %p42 = scmp.ne.s32.totalorder %s28, %s29
      %p43 = scmp.eq.s32.totalorder %s21, 1
      %p44 = por %p42, %p43
      %p46 = scmp.ne.s32.totalorder %s29, %s45
      %p47 = scmp.eq.s32.totalorder %s21, 0
      %p48 = por %p46, %p47
      %s50 = sadd.s32 %s49, 1
      %p53 = scmp.eq.s32.totalorder %s15, 1
      %p54 = scmp.ne.s32.totalorder %s49, %s51
      %p55 = scmp.eq.s32.totalorder %s15, 0
      %p56 = por %p54, %p55
      %p57 = scmp.ne.s32.totalorder %s49, %s51
      %p58 = scmp.eq.s32.totalorder %s20, 1
      %p59 = por %p57, %p58
      %p60 = scmp.ne.s32.totalorder %s51, %s52
      %p61 = scmp.eq.s32.totalorder %s20, 0
      %p62 = por %p60, %p61
      %p63 = scmp.ne.s32.totalorder %s51, %s52
      %p64 = scmp.eq.s32.totalorder %s21, 1
      %p65 = por %p63, %p64
      %p67 = scmp.ne.s32.totalorder %s52, %s66
      %p68 = scmp.eq.s32.totalorder %s21, 0
      %p69 = por %p67, %p68
      %s71 = sadd.s32 %s70, 1
      %p74 = scmp.eq.s32.totalorder %s15, 1
      %p75 = scmp.ne.s32.totalorder %s70, %s72
      %p76 = scmp.eq.s32.totalorder %s15, 0
      %p77 = por %p75, %p76
      %p78 = scmp.ne.s32.totalorder %s70, %s72
      %p79 = scmp.eq.s32.totalorder %s20, 1
      %p80 = por %p78, %p79
      %p81 = scmp.ne.s32.totalorder %s72, %s73
      %p82 = scmp.eq.s32.totalorder %s20, 0
      %p83 = por %p81, %p82
      %p84 = scmp.ne.s32.totalorder %s72, %s73
      %p85 = scmp.eq.s32.totalorder %s21, 1
      %p86 = por %p84, %p85
      %p88 = scmp.ne.s32.totalorder %s73, %s87
      %p89 = scmp.eq.s32.totalorder %s21, 0
      %p90 = por %p88, %p89
      %s92 = sadd.s32 %s91, 1
      %p95 = scmp.eq.s32.totalorder %s15, 1
      %p96 = scmp.ne.s32.totalorder %s91, %s93
      %p97 = scmp.eq.s32.totalorder %s15, 0
      %p98 = por %p96, %p97
      %p99 = scmp.ne.s32.totalorder %s91, %s93
      %p100 = scmp.eq.s32.totalorder %s20, 1
      %p101 = por %p99, %p100
      %p102 = scmp.ne.s32.totalorder %s93, %s94
      %p103 = scmp.eq.s32.totalorder %s20, 0
      %p104 = por %p102, %p103
      %p105 = scmp.ne.s32.totalorder %s93, %s94
      %p106 = scmp.eq.s32.totalorder %s21, 1
      %p107 = por %p105, %p106
      %p109 = scmp.ne.s32.totalorder %s94, %s108
      %p110 = scmp.eq.s32.totalorder %s21, 0
      %p111 = por %p109, %p110
      %s113 = sadd.s32 %s112, 1
      %p116 = scmp.eq.s32.totalorder %s15, 1
      %p117 = scmp.ne.s32.totalorder %s112, %s114
      %p118 = scmp.eq.s32.totalorder %s15, 0
      %p119 = por %p117, %p118
      %p120 = scmp.ne.s32.totalorder %s112, %s114
      %p121 = scmp.eq.s32.totalorder %s20, 1
      %p122 = por %p120, %p121
      %p123 = scmp.ne.s32.totalorder %s114, %s115
      %p124 = scmp.eq.s32.totalorder %s20, 0
      %p125 = por %p123, %p124
      %p126 = scmp.ne.s32.totalorder %s114, %s115
      %p127 = scmp.eq.s32.totalorder %s21, 1
      %p128 = por %p126, %p127
      %p130 = scmp.ne.s32.totalorder %s115, %s129
      %p131 = scmp.eq.s32.totalorder %s21, 0
      %p132 = por %p130, %p131
      %s134 = sadd.s32 %s133, 1
      %p137 = scmp.eq.s32.totalorder %s15, 1
      %p138 = scmp.ne.s32.totalorder %s133, %s135
      %p139 = scmp.eq.s32.totalorder %s15, 0
      %p140 = por %p138, %p139
      %p141 = scmp.ne.s32.totalorder %s133, %s135
      %p142 = scmp.eq.s32.totalorder %s20, 1
      %p143 = por %p141, %p142
      %p144 = scmp.ne.s32.totalorder %s135, %s136
      %p145 = scmp.eq.s32.totalorder %s20, 0
      %p146 = por %p144, %p145
      %p147 = scmp.ne.s32.totalorder %s135, %s136
      %p148 = scmp.eq.s32.totalorder %s21, 1
      %p149 = por %p147, %p148
      %p151 = scmp.ne.s32.totalorder %s136, %s150
      %p152 = scmp.eq.s32.totalorder %s21, 0
      %p153 = por %p151, %p152
      %s154 = ssub.s32 %s15, %s22
      %p155 = scmp.eq.s32.totalorder %s154, 0
      %s157 = sadd.s32 %s156, 1
      %s158 = scalar_select %p155, %s156, %s157
      %p161 = pneg %p155
      %p162 = scmp.eq.s32.totalorder %s15, 1
      %p163 = por %p161, %p162
      %p164 = scmp.ne.s32.totalorder %s156, %s159
      %p165 = scmp.eq.s32.totalorder %s15, 0
      %p166 = por %p164, %p165
      %p167 = scmp.ne.s32.totalorder %s156, %s159
      %p168 = scmp.eq.s32.totalorder %s20, 1
      %p169 = por %p167, %p168
      %p170 = scmp.ne.s32.totalorder %s159, %s160
      %p171 = scmp.eq.s32.totalorder %s20, 0
      %p172 = por %p170, %p171
      %p173 = scmp.ne.s32.totalorder %s159, %s160
      %p174 = scmp.eq.s32.totalorder %s21, 1
      %p175 = por %p173, %p174
      %p177 = scmp.ne.s32.totalorder %s160, %s176
      %p178 = scmp.eq.s32.totalorder %s21, 0
      %p179 = por %p177, %p178
      %p180 = scmp.le.s32.totalorder 1, %s15
      %p181 = scmp.lt.s32.totalorder %s15, 3
      %p182 = pnand %p180, %p181
      %p183 = pneg %p182
      // Predicated region
      $region9: #{tpu_custom_call.1} parent=5 // pred_check
        _
      $region10: #{tpu_custom_call.1} parent=5 // pred_check_branch
        %185 = sbr.rel (%p182) target = $region12
      $region11: #{tpu_custom_call.1} parent=5 // pred_region
        %s186 = ssub.s32 %s15, 1
        // Predicated region
        $region13: #{tpu_custom_call.1} parent=11 // pred_check
          %p187 = pneg %p62
        $region14: #{tpu_custom_call.1} parent=11 // pred_check_branch
          %189 = sbr.rel (%p187) target = $region16
        $region15: #{tpu_custom_call.1} parent=11 // pred_region
          _
        $region16: #{tpu_custom_call.1} parent=11 // pred_fallthru
          _
        // Predicated region
        $region17: #{tpu_custom_call.1} parent=11 // pred_check
          %p190 = pneg %p83
        $region18: #{tpu_custom_call.1} parent=11 // pred_check_branch
          %192 = sbr.rel (%p190) target = $region20
        $region19: #{tpu_custom_call.1} parent=11 // pred_region
          _
        $region20: #{tpu_custom_call.1} parent=11 // pred_fallthru
          _
        // Predicated region
        $region21: #{tpu_custom_call.1} parent=11 // pred_check
          %p193 = pneg %p104
        $region22: #{tpu_custom_call.1} parent=11 // pred_check_branch
          %195 = sbr.rel (%p193) target = $region24
        $region23: #{tpu_custom_call.1} parent=11 // pred_region
          _
        $region24: #{tpu_custom_call.1} parent=11 // pred_fallthru
          _
        // Predicated region
        $region25: #{tpu_custom_call.1} parent=11 // pred_check
          %p196 = pneg %p125
        $region26: #{tpu_custom_call.1} parent=11 // pred_check_branch
          %198 = sbr.rel (%p196) target = $region28
        $region27: #{tpu_custom_call.1} parent=11 // pred_region
          _
        $region28: #{tpu_custom_call.1} parent=11 // pred_fallthru
          _
        // Predicated region
        $region29: #{tpu_custom_call.1} parent=11 // pred_check
          %p199 = pneg %p146
        $region30: #{tpu_custom_call.1} parent=11 // pred_check_branch
          %201 = sbr.rel (%p199) target = $region32
        $region31: #{tpu_custom_call.1} parent=11 // pred_region
          _
        $region32: #{tpu_custom_call.1} parent=11 // pred_fallthru
          _
      $region12: #{tpu_custom_call.1} parent=5 // pred_fallthru
        _
      %p202 = scmp.lt.s32.totalorder %s15, 2
      // Predicated region
      $region33: #{tpu_custom_call.1} parent=5 // pred_check
        %p203 = pneg %p202
      $region34: #{tpu_custom_call.1} parent=5 // pred_check_branch
        %205 = sbr.rel (%p203) target = $region36
      $region35: #{tpu_custom_call.1} parent=5 // pred_region
        // Predicated region
        $region37: #{tpu_custom_call.1} parent=35 // pred_check
          %p206 = pneg %p35
        $region38: #{tpu_custom_call.1} parent=35 // pred_check_branch
          %208 = sbr.rel (%p206) target = $region40
        $region39: #{tpu_custom_call.1} parent=35 // pred_region
          %s209 = sand.u32 %s25, 1
          %s210 = scalar_lea.sflag [#allocation3], %s209
          %s211 = sand.u32 %s25, 1
          %s212 = smul.addr %s211, 256
          %s213 = scalar_lea.vmem [#allocation2], %s212
          %215 = vsyncadd %s210, 0
          %s216 = smul.addr %s15, 32
          %s217 = smul.addr %s216, 8
          %s218 = scalar_lea.hbm %s0, %s217
          %s219 = sshll.u32 %s218, 4
          %s220 = int_to_ptr.hbm [resolvable:$true] %s219
          %s221 = sshll.u32 %s213, 4
          %s222 = int_to_ptr.vmem [resolvable:$true] %s221
          %227 = dma.hbm_to_vmem [thread:$0]  %s220, 4096, %s222, %s210, 128, 128, 8
        $region40: #{tpu_custom_call.1} parent=35 // pred_fallthru
          _
      $region36: #{tpu_custom_call.1} parent=5 // pred_fallthru
        _
      %p228 = scmp.le.s32.totalorder 1, %s15
      %p229 = scmp.lt.s32.totalorder %s15, 3
      %p230 = pnand %p228, %p229
      %p231 = pneg %p230
      // Predicated region
      $region41: #{tpu_custom_call.1} parent=5 // pred_check
        _
      $region42: #{tpu_custom_call.1} parent=5 // pred_check_branch
        %233 = sbr.rel (%p230) target = $region44
      $region43: #{tpu_custom_call.1} parent=5 // pred_region
        %s234 = ssub.s32 %s15, 1
        %s235 = sand.u32 %s28, 1
        %s236 = scalar_lea.sflag [#allocation3], %s235
        %s237 = sand.u32 %s28, 1
        %s238 = smul.addr %s237, 256
        %s239 = scalar_lea.vmem [#allocation2], %s238
        // Predicated region
        $region45: #{tpu_custom_call.1} parent=43 // pred_check
          %p240 = pneg %p41
        $region46: #{tpu_custom_call.1} parent=43 // pred_check_branch
          %242 = sbr.rel (%p240) target = $region48
        $region47: #{tpu_custom_call.1} parent=43 // pred_region
          %244 = dma.done %s236, 4096
        $region48: #{tpu_custom_call.1} parent=43 // pred_fallthru
          _
        %s245 = sand.u32 %s28, 1
        %s246 = scalar_lea.sflag [#allocation3], %s245
        %s247 = sand.u32 %s28, 1
        %s248 = smul.addr %s247, 256
        %s249 = scalar_lea.vmem [#allocation2], %s248
        %p250 = pneg %p41
        %p251 = pneg %p38
        %p252 = pneg %p62
        %p253 = pneg %p59
        %p254 = pneg %p83
        %p255 = pneg %p80
        %p256 = pneg %p104
        %p257 = pneg %p101
        %p258 = pneg %p125
        %p259 = pneg %p122
        %p260 = pneg %p146
        %p261 = pneg %p143
        %p262 = pneg %p172
        %p263 = pneg %p169
        %p264 = scmp.lt.s32.totalorder %s20, 1
        %s265 = scalar_select %p264, %s20, 1
        %s266 = smul.addr %s265, 32
        %s267 = smul.addr %s266, 8
        %s268 = scalar_lea.vmem %s6, %s267
        %p269 = scmp.lt.s32.totalorder %s20, 1
        %s270 = scalar_select %p269, %s20, 1
        %s271 = smul.addr %s270, 32
        %s272 = smul.addr %s271, 8
        %s273 = scalar_lea.vmem %s6, %s272
        %v275 = vld [vmem:[%s2] sm:$0x1]
        %v276 = vld [vmem:[%s3] sm:$0x1]
        %v277 = vld [vmem:[%s239] sm:$0xff]
        %v278 = vld [vmem:[%s239 + $0x8] sm:$0xff]
        %v279 = vld [vmem:[%s239 + $0x10] sm:$0xff]
        %v280 = vld [vmem:[%s239 + $0x18] sm:$0xff]
        %v281 = vld [vmem:[%s239 + $0x20] sm:$0xff]
        %v282 = vld [vmem:[%s239 + $0x28] sm:$0xff]
        %v283 = vld [vmem:[%s239 + $0x30] sm:$0xff]
        %v284 = vld [vmem:[%s239 + $0x38] sm:$0xff]
        %v285 = vld [vmem:[%s239 + $0x40] sm:$0xff]
        %v286 = vld [vmem:[%s239 + $0x48] sm:$0xff]
        %v287 = vld [vmem:[%s239 + $0x50] sm:$0xff]
        %v288 = vld [vmem:[%s239 + $0x58] sm:$0xff]
        %v289 = vld [vmem:[%s239 + $0x60] sm:$0xff]
        %v290 = vld [vmem:[%s239 + $0x68] sm:$0xff]
        %v291 = vld [vmem:[%s239 + $0x70] sm:$0xff]
        %v292 = vld [vmem:[%s239 + $0x78] sm:$0xff]
        %v293 = vld [vmem:[%s239 + $0x80] sm:$0xff]
        %v294 = vld [vmem:[%s239 + $0x88] sm:$0xff]
        %v295 = vld [vmem:[%s239 + $0x90] sm:$0xff]
        %v296 = vld [vmem:[%s239 + $0x98] sm:$0xff]
        %v297 = vld [vmem:[%s239 + $0xa0] sm:$0xff]
        %v298 = vld [vmem:[%s239 + $0xa8] sm:$0xff]
        %v299 = vld [vmem:[%s239 + $0xb0] sm:$0xff]
        %v300 = vld [vmem:[%s239 + $0xb8] sm:$0xff]
        %v301 = vld [vmem:[%s239 + $0xc0] sm:$0xff]
        %v302 = vld [vmem:[%s239 + $0xc8] sm:$0xff]
        %v303 = vld [vmem:[%s239 + $0xd0] sm:$0xff]
        %v304 = vld [vmem:[%s239 + $0xd8] sm:$0xff]
        %v305 = vld [vmem:[%s239 + $0xe0] sm:$0xff]
        %v306 = vld [vmem:[%s239 + $0xe8] sm:$0xff]
        %v307 = vld [vmem:[%s239 + $0xf0] sm:$0xff]
        %v308 = vld [vmem:[%s239 + $0xf8] sm:$0xff]
        %v310 = vperm.slane %v275, 0
        %v312 = vmul.f32 %v277, %v310
        %v313 = vmul.f32 %v278, %v310
        %v314 = vmul.f32 %v279, %v310
        %v315 = vmul.f32 %v280, %v310
        %v316 = vmul.f32 %v281, %v310
        %v317 = vmul.f32 %v282, %v310
        %v318 = vmul.f32 %v283, %v310
        %v319 = vmul.f32 %v284, %v310
        %v320 = vmul.f32 %v285, %v310
        %v321 = vmul.f32 %v286, %v310
        %v322 = vmul.f32 %v287, %v310
        %v323 = vmul.f32 %v288, %v310
        %v324 = vmul.f32 %v289, %v310
        %v325 = vmul.f32 %v290, %v310
        %v326 = vmul.f32 %v291, %v310
        %v327 = vmul.f32 %v292, %v310
        %v328 = vmul.f32 %v293, %v310
        %v329 = vmul.f32 %v294, %v310
        %v330 = vmul.f32 %v295, %v310
        %v331 = vmul.f32 %v296, %v310
        %v332 = vmul.f32 %v297, %v310
        %v333 = vmul.f32 %v298, %v310
        %v334 = vmul.f32 %v299, %v310
        %v335 = vmul.f32 %v300, %v310
        %v336 = vmul.f32 %v301, %v310
        %v337 = vmul.f32 %v302, %v310
        %v338 = vmul.f32 %v303, %v310
        %v339 = vmul.f32 %v304, %v310
        %v340 = vmul.f32 %v305, %v310
        %v341 = vmul.f32 %v306, %v310
        %v342 = vmul.f32 %v307, %v310
        %v343 = vmul.f32 %v308, %v310
        %v345 = vperm.slane %v276, 0
        %v347 = vadd.f32 %v312, %v345
        %v348 = vadd.f32 %v313, %v345
        %v349 = vadd.f32 %v314, %v345
        %v350 = vadd.f32 %v315, %v345
        %v351 = vadd.f32 %v316, %v345
        %v352 = vadd.f32 %v317, %v345
        %v353 = vadd.f32 %v318, %v345
        %v354 = vadd.f32 %v319, %v345
        %v355 = vadd.f32 %v320, %v345
        %v356 = vadd.f32 %v321, %v345
        %v357 = vadd.f32 %v322, %v345
        %v358 = vadd.f32 %v323, %v345
        %v359 = vadd.f32 %v324, %v345
        %v360 = vadd.f32 %v325, %v345
        %v361 = vadd.f32 %v326, %v345
        %v362 = vadd.f32 %v327, %v345
        %v363 = vadd.f32 %v328, %v345
        %v364 = vadd.f32 %v329, %v345
        %v365 = vadd.f32 %v330, %v345
        %v366 = vadd.f32 %v331, %v345
        %v367 = vadd.f32 %v332, %v345
        %v368 = vadd.f32 %v333, %v345
        %v369 = vadd.f32 %v334, %v345
        %v370 = vadd.f32 %v335, %v345
        %v371 = vadd.f32 %v336, %v345
        %v372 = vadd.f32 %v337, %v345
        %v373 = vadd.f32 %v338, %v345
        %v374 = vadd.f32 %v339, %v345
        %v375 = vadd.f32 %v340, %v345
        %v376 = vadd.f32 %v341, %v345
        %v377 = vadd.f32 %v342, %v345
        %v378 = vadd.f32 %v343, %v345
        %v379 = vmax.f32 %v347, 0.0
        %v380 = vmax.f32 %v348, 0.0
        %v381 = vmax.f32 %v349, 0.0
        %v382 = vmax.f32 %v350, 0.0
        %v383 = vmax.f32 %v351, 0.0
        %v384 = vmax.f32 %v352, 0.0
        %v385 = vmax.f32 %v353, 0.0
        %v386 = vmax.f32 %v354, 0.0
        %v387 = vmax.f32 %v355, 0.0
        %v388 = vmax.f32 %v356, 0.0
        %v389 = vmax.f32 %v357, 0.0
        %v390 = vmax.f32 %v358, 0.0
        %v391 = vmax.f32 %v359, 0.0
        %v392 = vmax.f32 %v360, 0.0
        %v393 = vmax.f32 %v361, 0.0
        %v394 = vmax.f32 %v362, 0.0
        %v395 = vmax.f32 %v363, 0.0
        %v396 = vmax.f32 %v364, 0.0
        %v397 = vmax.f32 %v365, 0.0
        %v398 = vmax.f32 %v366, 0.0
        %v399 = vmax.f32 %v367, 0.0
        %v400 = vmax.f32 %v368, 0.0
        %v401 = vmax.f32 %v369, 0.0
        %v402 = vmax.f32 %v370, 0.0
        %v403 = vmax.f32 %v371, 0.0
        %v404 = vmax.f32 %v372, 0.0
        %v405 = vmax.f32 %v373, 0.0
        %v406 = vmax.f32 %v374, 0.0
        %v407 = vmax.f32 %v375, 0.0
        %v408 = vmax.f32 %v376, 0.0
        %v409 = vmax.f32 %v377, 0.0
        %v410 = vmax.f32 %v378, 0.0
        %v411 = vpack.c.bf16 %v380, %v379
        %v412 = vpack.c.bf16 %v382, %v381
        %v413 = vpack.c.bf16 %v384, %v383
        %v414 = vpack.c.bf16 %v386, %v385
        %v415 = vpack.c.bf16 %v388, %v387
        %v416 = vpack.c.bf16 %v390, %v389
        %v417 = vpack.c.bf16 %v392, %v391
        %v418 = vpack.c.bf16 %v394, %v393
        %v419 = vpack.c.bf16 %v396, %v395
        %v420 = vpack.c.bf16 %v398, %v397
        %v421 = vpack.c.bf16 %v400, %v399
        %v422 = vpack.c.bf16 %v402, %v401
        %v423 = vpack.c.bf16 %v404, %v403
        %v424 = vpack.c.bf16 %v406, %v405
        %v425 = vpack.c.bf16 %v408, %v407
        %v426 = vpack.c.bf16 %v410, %v409
        %v427 = vld [vmem:[%s1] sm:$0xf]
        %v428 = vld [vmem:[%s1 + $0x4] sm:$0xf]
        %v431 = vunpack.c.l.b16 %v427
        %v432 = vunpack.c.l.b16 %v428
        %v433 = vpack.c.b16 %v432, %v431
        %vm435 = vcmask 130048
        %v437 = vsel %vm435, %v411, 0
        %v440 = vsel %vm435, %v412, 0
        %v443 = vsel %vm435, %v413, 0
        %v446 = vsel %vm435, %v414, 0
        %v449 = vsel %vm435, %v415, 0
        %v452 = vsel %vm435, %v416, 0
        %v455 = vsel %vm435, %v417, 0
        %v458 = vsel %vm435, %v418, 0
        %v461 = vsel %vm435, %v419, 0
        %v464 = vsel %vm435, %v420, 0
        %v467 = vsel %vm435, %v421, 0
        %v470 = vsel %vm435, %v422, 0
        %v473 = vsel %vm435, %v423, 0
        %v476 = vsel %vm435, %v424, 0
        %v479 = vsel %vm435, %v425, 0
        %v482 = vsel %vm435, %v426, 0
        %484 = vmatpush.bf16.msra.mxu0 0
        %485 = vmatpush.bf16.msra.mxu0 0
        %486 = vmatpush.bf16.msra.mxu0 0
        %487 = vmatpush.bf16.msra.mxu0 0
        %488 = vmatpush.bf16.msra.mxu0 0
        %489 = vmatpush.bf16.msra.mxu0 0
        %490 = vmatpush.bf16.msra.mxu0 0
        %491 = vmatpush.bf16.msra.mxu0 %v433
        %492 = vmatmul.bf16.gmra.mxu0 %v437
        %v493 = vpop.f32.mrf.mxu0
        %v494 = vadd.f32 0.0, %v493
        %v495 = vpop.f32.mrf.mxu0
        %v496 = vadd.f32 0.0, %v495
        %497 = vmatmul.bf16.gmra.mxu0 %v440
        %v498 = vpop.f32.mrf.mxu0
        %v499 = vadd.f32 0.0, %v498
        %v500 = vpop.f32.mrf.mxu0
        %v501 = vadd.f32 0.0, %v500
        %502 = vmatmul.bf16.gmra.mxu0 %v443
        %v503 = vpop.f32.mrf.mxu0
        %v504 = vadd.f32 0.0, %v503
        %v505 = vpop.f32.mrf.mxu0
        %v506 = vadd.f32 0.0, %v505
        %507 = vmatmul.bf16.gmra.mxu0 %v446
        %v508 = vpop.f32.mrf.mxu0
        %v509 = vadd.f32 0.0, %v508
        %v510 = vpop.f32.mrf.mxu0
        %v511 = vadd.f32 0.0, %v510
        %512 = vmatmul.bf16.gmra.mxu0 %v449
        %v513 = vpop.f32.mrf.mxu0
        %v514 = vadd.f32 0.0, %v513
        %v515 = vpop.f32.mrf.mxu0
        %v516 = vadd.f32 0.0, %v515
        %517 = vmatmul.bf16.gmra.mxu0 %v452
        %v518 = vpop.f32.mrf.mxu0
        %v519 = vadd.f32 0.0, %v518
        %v520 = vpop.f32.mrf.mxu0
        %v521 = vadd.f32 0.0, %v520
        %522 = vmatmul.bf16.gmra.mxu0 %v455
        %v523 = vpop.f32.mrf.mxu0
        %v524 = vadd.f32 0.0, %v523
        %v525 = vpop.f32.mrf.mxu0
        %v526 = vadd.f32 0.0, %v525
        %527 = vmatmul.bf16.gmra.mxu0 %v458
        %v528 = vpop.f32.mrf.mxu0
        %v529 = vadd.f32 0.0, %v528
        %v530 = vpop.f32.mrf.mxu0
        %v531 = vadd.f32 0.0, %v530
        %532 = vmatmul.bf16.gmra.mxu0 %v461
        %v533 = vpop.f32.mrf.mxu0
        %v534 = vadd.f32 0.0, %v533
        %v535 = vpop.f32.mrf.mxu0
        %v536 = vadd.f32 0.0, %v535
        %537 = vmatmul.bf16.gmra.mxu0 %v464
        %v538 = vpop.f32.mrf.mxu0
        %v539 = vadd.f32 0.0, %v538
        %v540 = vpop.f32.mrf.mxu0
        %v541 = vadd.f32 0.0, %v540
        %542 = vmatmul.bf16.gmra.mxu0 %v467
        %v543 = vpop.f32.mrf.mxu0
        %v544 = vadd.f32 0.0, %v543
        %v545 = vpop.f32.mrf.mxu0
        %v546 = vadd.f32 0.0, %v545
        %547 = vmatmul.bf16.gmra.mxu0 %v470
        %v548 = vpop.f32.mrf.mxu0
        %v549 = vadd.f32 0.0, %v548
        %v550 = vpop.f32.mrf.mxu0
        %v551 = vadd.f32 0.0, %v550
        %552 = vmatmul.bf16.gmra.mxu0 %v473
        %v553 = vpop.f32.mrf.mxu0
        %v554 = vadd.f32 0.0, %v553
        %v555 = vpop.f32.mrf.mxu0
        %v556 = vadd.f32 0.0, %v555
        %557 = vmatmul.bf16.gmra.mxu0 %v476
        %v558 = vpop.f32.mrf.mxu0
        %v559 = vadd.f32 0.0, %v558
        %v560 = vpop.f32.mrf.mxu0
        %v561 = vadd.f32 0.0, %v560
        %562 = vmatmul.bf16.gmra.mxu0 %v479
        %v563 = vpop.f32.mrf.mxu0
        %v564 = vadd.f32 0.0, %v563
        %v565 = vpop.f32.mrf.mxu0
        %v566 = vadd.f32 0.0, %v565
        %567 = vmatmul.bf16.gmra.mxu0 %v482
        %v568 = vpop.f32.mrf.mxu0
        %v569 = vadd.f32 0.0, %v568
        %v570 = vpop.f32.mrf.mxu0
        %v571 = vadd.f32 0.0, %v570
        %572 = vdwg.mxu0
        %v573 = vld [vmem:[%s4] sm:$0x1]
        %v575 = vperm.slane %v573, 0
        %v577 = vmul.f32 %v494, %v575
        %v578 = vmul.f32 %v496, %v575
        %v579 = vmul.f32 %v499, %v575
        %v580 = vmul.f32 %v501, %v575
        %v581 = vmul.f32 %v504, %v575
        %v582 = vmul.f32 %v506, %v575
        %v583 = vmul.f32 %v509, %v575
        %v584 = vmul.f32 %v511, %v575
        %v585 = vmul.f32 %v514, %v575
        %v586 = vmul.f32 %v516, %v575
        %v587 = vmul.f32 %v519, %v575
        %v588 = vmul.f32 %v521, %v575
        %v589 = vmul.f32 %v524, %v575
        %v590 = vmul.f32 %v526, %v575
        %v591 = vmul.f32 %v529, %v575
        %v592 = vmul.f32 %v531, %v575
        %v593 = vmul.f32 %v534, %v575
        %v594 = vmul.f32 %v536, %v575
        %v595 = vmul.f32 %v539, %v575
        %v596 = vmul.f32 %v541, %v575
        %v597 = vmul.f32 %v544, %v575
        %v598 = vmul.f32 %v546, %v575
        %v599 = vmul.f32 %v549, %v575
        %v600 = vmul.f32 %v551, %v575
        %v601 = vmul.f32 %v554, %v575
        %v602 = vmul.f32 %v556, %v575
        %v603 = vmul.f32 %v559, %v575
        %v604 = vmul.f32 %v561, %v575
        %v605 = vmul.f32 %v564, %v575
        %v606 = vmul.f32 %v566, %v575
        %v607 = vmul.f32 %v569, %v575
        %v608 = vmul.f32 %v571, %v575
        %v609 = vld [vmem:[%s5] sm:$0x1]
        %v611 = vperm.slane %v609, 0
        %v613 = vadd.f32 %v577, %v611
        %v614 = vadd.f32 %v578, %v611
        %v615 = vadd.f32 %v579, %v611
        %v616 = vadd.f32 %v580, %v611
        %v617 = vadd.f32 %v581, %v611
        %v618 = vadd.f32 %v582, %v611
        %v619 = vadd.f32 %v583, %v611
        %v620 = vadd.f32 %v584, %v611
        %v621 = vadd.f32 %v585, %v611
        %v622 = vadd.f32 %v586, %v611
        %v623 = vadd.f32 %v587, %v611
        %v624 = vadd.f32 %v588, %v611
        %v625 = vadd.f32 %v589, %v611
        %v626 = vadd.f32 %v590, %v611
        %v627 = vadd.f32 %v591, %v611
        %v628 = vadd.f32 %v592, %v611
        %v629 = vadd.f32 %v593, %v611
        %v630 = vadd.f32 %v594, %v611
        %v631 = vadd.f32 %v595, %v611
        %v632 = vadd.f32 %v596, %v611
        %v633 = vadd.f32 %v597, %v611
        %v634 = vadd.f32 %v598, %v611
        %v635 = vadd.f32 %v599, %v611
        %v636 = vadd.f32 %v600, %v611
        %v637 = vadd.f32 %v601, %v611
        %v638 = vadd.f32 %v602, %v611
        %v639 = vadd.f32 %v603, %v611
        %v640 = vadd.f32 %v604, %v611
        %v641 = vadd.f32 %v605, %v611
        %v642 = vadd.f32 %v606, %v611
        %v643 = vadd.f32 %v607, %v611
        %v644 = vadd.f32 %v608, %v611
        %v645 = vmax.f32 %v613, 0.0
        %v646 = vmax.f32 %v614, 0.0
        %v647 = vmax.f32 %v615, 0.0
        %v648 = vmax.f32 %v616, 0.0
        %v649 = vmax.f32 %v617, 0.0
        %v650 = vmax.f32 %v618, 0.0
        %v651 = vmax.f32 %v619, 0.0
        %v652 = vmax.f32 %v620, 0.0
        %v653 = vmax.f32 %v621, 0.0
        %v654 = vmax.f32 %v622, 0.0
        %v655 = vmax.f32 %v623, 0.0
        %v656 = vmax.f32 %v624, 0.0
        %v657 = vmax.f32 %v625, 0.0
        %v658 = vmax.f32 %v626, 0.0
        %v659 = vmax.f32 %v627, 0.0
        %v660 = vmax.f32 %v628, 0.0
        %v661 = vmax.f32 %v629, 0.0
        %v662 = vmax.f32 %v630, 0.0
        %v663 = vmax.f32 %v631, 0.0
        %v664 = vmax.f32 %v632, 0.0
        %v665 = vmax.f32 %v633, 0.0
        %v666 = vmax.f32 %v634, 0.0
        %v667 = vmax.f32 %v635, 0.0
        %v668 = vmax.f32 %v636, 0.0
        %v669 = vmax.f32 %v637, 0.0
        %v670 = vmax.f32 %v638, 0.0
        %v671 = vmax.f32 %v639, 0.0
        %v672 = vmax.f32 %v640, 0.0
        %v673 = vmax.f32 %v641, 0.0
        %v674 = vmax.f32 %v642, 0.0
        %v675 = vmax.f32 %v643, 0.0
        %v676 = vmax.f32 %v644, 0.0
        %vm677 = vcmask 64512
        %678 = vst.msk [vmem:[%s273] sm:$0xff] %vm677, %v645
        %679 = vst.msk [vmem:[%s273 + $0x8] sm:$0xff] %vm677, %v646
        %680 = vst.msk [vmem:[%s273 + $0x10] sm:$0xff] %vm677, %v647
        %681 = vst.msk [vmem:[%s273 + $0x18] sm:$0xff] %vm677, %v648
        %682 = vst.msk [vmem:[%s273 + $0x20] sm:$0xff] %vm677, %v649
        %683 = vst.msk [vmem:[%s273 + $0x28] sm:$0xff] %vm677, %v650
        %684 = vst.msk [vmem:[%s273 + $0x30] sm:$0xff] %vm677, %v651
        %685 = vst.msk [vmem:[%s273 + $0x38] sm:$0xff] %vm677, %v652
        %686 = vst.msk [vmem:[%s273 + $0x40] sm:$0xff] %vm677, %v653
        %687 = vst.msk [vmem:[%s273 + $0x48] sm:$0xff] %vm677, %v654
        %688 = vst.msk [vmem:[%s273 + $0x50] sm:$0xff] %vm677, %v655
        %689 = vst.msk [vmem:[%s273 + $0x58] sm:$0xff] %vm677, %v656
        %690 = vst.msk [vmem:[%s273 + $0x60] sm:$0xff] %vm677, %v657
        %691 = vst.msk [vmem:[%s273 + $0x68] sm:$0xff] %vm677, %v658
        %692 = vst.msk [vmem:[%s273 + $0x70] sm:$0xff] %vm677, %v659
        %693 = vst.msk [vmem:[%s273 + $0x78] sm:$0xff] %vm677, %v660
        %694 = vst.msk [vmem:[%s273 + $0x80] sm:$0xff] %vm677, %v661
        %695 = vst.msk [vmem:[%s273 + $0x88] sm:$0xff] %vm677, %v662
        %696 = vst.msk [vmem:[%s273 + $0x90] sm:$0xff] %vm677, %v663
        %697 = vst.msk [vmem:[%s273 + $0x98] sm:$0xff] %vm677, %v664
        %698 = vst.msk [vmem:[%s273 + $0xa0] sm:$0xff] %vm677, %v665
        %699 = vst.msk [vmem:[%s273 + $0xa8] sm:$0xff] %vm677, %v666
        %700 = vst.msk [vmem:[%s273 + $0xb0] sm:$0xff] %vm677, %v667
        %701 = vst.msk [vmem:[%s273 + $0xb8] sm:$0xff] %vm677, %v668
        %702 = vst.msk [vmem:[%s273 + $0xc0] sm:$0xff] %vm677, %v669
        %703 = vst.msk [vmem:[%s273 + $0xc8] sm:$0xff] %vm677, %v670
        %704 = vst.msk [vmem:[%s273 + $0xd0] sm:$0xff] %vm677, %v671
        %705 = vst.msk [vmem:[%s273 + $0xd8] sm:$0xff] %vm677, %v672
        %706 = vst.msk [vmem:[%s273 + $0xe0] sm:$0xff] %vm677, %v673
        %707 = vst.msk [vmem:[%s273 + $0xe8] sm:$0xff] %vm677, %v674
        %708 = vst.msk [vmem:[%s273 + $0xf0] sm:$0xff] %vm677, %v675
        %709 = vst.msk [vmem:[%s273 + $0xf8] sm:$0xff] %vm677, %v676
        %p710 = scmp.lt.s32.totalorder %s20, 1
        %s711 = scalar_select %p710, %s20, 1
        %s712 = smul.addr %s711, 32
        %s713 = smul.addr %s712, 8
        %s714 = scalar_lea.vmem %s6, %s713
        // Predicated region
        $region49: #{tpu_custom_call.1} parent=43 // pred_check
          %p715 = pneg %p169
        $region50: #{tpu_custom_call.1} parent=43 // pred_check_branch
          %717 = sbr.rel (%p715) target = $region52
        $region51: #{tpu_custom_call.1} parent=43 // pred_region
          _
        $region52: #{tpu_custom_call.1} parent=43 // pred_fallthru
          _
      $region44: #{tpu_custom_call.1} parent=5 // pred_fallthru
        _
      %p718 = scmp.le.s32.totalorder 2, %s15
      // Predicated region
      $region53: #{tpu_custom_call.1} parent=5 // pred_check
        %p719 = pneg %p718
      $region54: #{tpu_custom_call.1} parent=5 // pred_check_branch
        %721 = sbr.rel (%p719) target = $region56
      $region55: #{tpu_custom_call.1} parent=5 // pred_region
        %s722 = ssub.s32 %s15, 2
        // Predicated region
        $region57: #{tpu_custom_call.1} parent=55 // pred_check
          %p723 = pneg %p175
        $region58: #{tpu_custom_call.1} parent=55 // pred_check_branch
          %725 = sbr.rel (%p723) target = $region60
        $region59: #{tpu_custom_call.1} parent=55 // pred_region
          %p726 = scmp.lt.s32.totalorder %s21, 1
          %s727 = scalar_select %p726, %s21, 1
          %s728 = smul.addr %s727, 32
          %s729 = smul.addr %s728, 8
          %s730 = scalar_lea.vmem %s6, %s729
        $region60: #{tpu_custom_call.1} parent=55 // pred_fallthru
          _
      $region56: #{tpu_custom_call.1} parent=5 // pred_fallthru
        _
    $region6: #{tpu_custom_call.1} parent=1 // loop_footer
      %s19 = sadd.s32 1, %s15
    $region7: #{tpu_custom_call.1} parent=1 // loop_footer_branch
      %14 = sbr.rel target = $region3
    $region8: #{tpu_custom_call.1} parent=1 // loop_exit
      _
    %731 = vsyncpa [#allocation3], 1
    %s732 = scalar_lea.sflag [#allocation3], 1
    %733 = vsyncpa %s732, 1

</llo_original>
